<compile_context>
chip_gen: v7x
topology: tpu7x:2x2x1
jax: 0.10.0
libtpu: 0.0.40
codegen_flags: <defaults>
</compile_context>

<pallas_src>
import functools

import jax
import jax.numpy as jnp
from jax.experimental import pallas as pl
from jax.experimental.pallas import tpu as pltpu


def _fused_conv_leakyrelu_kernel(w_ref, b_ref, x_ref, o_ref):
  """One MXU matmul + bias + leaky_relu on a lane-dense pixel tile.

  w_ref : (Cout, Kp)  folded [3x3 conv + 1x1 shortcut] weights
  b_ref : (Cout, 1)   folded bias (b3 + b1)
  x_ref : (Kp, TM)    im2col patches tile, transposed (K on sublanes, pixels on lanes)
  o_ref : (Cout, TM)  leaky_relu(conv3x3(x) + conv1x1(x)), one column per pixel
  """
  y = jnp.dot(w_ref[...], x_ref[...], preferred_element_type=jnp.float32)
  y = y + b_ref[...]
  # PyTorch F.leaky_relu default negative_slope = 0.01
  o_ref[...] = jnp.where(y > 0.0, y, 0.01 * y)


@functools.partial(jax.jit, static_argnames=("tile_m",))
def residual_block_forward(x_nchw, w3_oihw, b3, w1_oihw, b1, *, tile_m=512):
  """x_nchw: (N, Cin, H, W).  Returns (N, Cout, H, W), matching PyTorch."""
  N, Cin, H, W = x_nchw.shape
  Cout = w3_oihw.shape[0]
  K = 9 * Cin
  M = N * H * W
  Kp = -(-K // 8) * 8                 # pad contraction dim to a sublane multiple
  TM = min(tile_m, -(-M // 128) * 128)
  TM = -(-TM // 128) * 128            # lane-dense pixel tile
  Mp = -(-M // TM) * TM               # pad pixel dim to a whole number of tiles

  # ---- fold the 1x1 shortcut into the 3x3 center tap (mathematically exact) --
  w3f = w3_oihw.astype(jnp.float32).at[:, :, 1, 1].add(
      w1_oihw[:, :, 0, 0].astype(jnp.float32))            # (Cout, Cin, 3, 3)
  bias = (b3 + b1).astype(jnp.float32).reshape(Cout, 1)

  # (Cout,Cin,3,3) -> (3,3,Cin,Cout) -> (9*Cin, Cout) -> transpose -> pad K.
  w_mat = jnp.transpose(w3f, (2, 3, 1, 0)).reshape(K, Cout)
  w_mat = jnp.pad(w_mat.T, ((0, 0), (0, Kp - K)))         # (Cout, Kp)

  # ---- im2col in the wrapper (XLA glue): 9 shifted views, (dy,dx,c) order ----
  x_nhwc = jnp.transpose(x_nchw, (0, 2, 3, 1)).astype(jnp.float32)
  xp = jnp.pad(x_nhwc, ((0, 0), (1, 1), (1, 1), (0, 0)))  # zero halo, pad=1
  taps = [xp[:, dy:dy + H, dx:dx + W, :] for dy in range(3) for dx in range(3)]
  patches = jnp.concatenate(taps, axis=-1).reshape(M, K)  # (N*H*W, 9*Cin)
  patches_t = jnp.pad(patches.T, ((0, Kp - K), (0, Mp - M)))  # (Kp, Mp)

  grid = (Mp // TM,)
  out_t = pl.pallas_call(
      _fused_conv_leakyrelu_kernel,
      out_shape=jax.ShapeDtypeStruct((Cout, Mp), jnp.float32),
      grid_spec=pltpu.PrefetchScalarGridSpec(
          num_scalar_prefetch=0,
          grid=grid,
          in_specs=[
              pl.BlockSpec((Cout, Kp), lambda m: (0, 0)),   # weights: replicated
              pl.BlockSpec((Cout, 1), lambda m: (0, 0)),    # bias: replicated
              pl.BlockSpec((Kp, TM), lambda m: (0, m)),     # patches: tiled over pixels
          ],
          out_specs=pl.BlockSpec((Cout, TM), lambda m: (0, m)),
      ),
      compiler_params=pltpu.CompilerParams(
          dimension_semantics=("parallel",)),
  )(w_mat, bias, patches_t)

  out = out_t[:, :M].reshape(Cout, N, H, W)
  return jnp.transpose(out, (1, 0, 2, 3))                  # back to NCHW


def _reference_forward(x_nchw, w3_oihw, b3, w1_oihw, b1):
  """Plain-JAX reference (mirrors PyTorch semantics) for validation."""
  dn = jax.lax.conv_dimension_numbers(x_nchw.shape, w3_oihw.shape,
                                      ("NCHW", "OIHW", "NCHW"))
  blk = jax.lax.conv_general_dilated(x_nchw, w3_oihw, (1, 1), "SAME",
                                     dimension_numbers=dn)
  blk = blk + b3.reshape(1, -1, 1, 1)
  sc = jax.lax.conv_general_dilated(x_nchw, w1_oihw, (1, 1), "SAME",
                                    dimension_numbers=dn)
  sc = sc + b1.reshape(1, -1, 1, 1)
  y = blk + sc
  return jnp.where(y > 0, y, 0.01 * y)


if __name__ == "__main__":
  key = jax.random.PRNGKey(0)
  k_x, k_w3, k_b3, k_w1, k_b1 = jax.random.split(key, 5)

  N, Cin, Cout, H, W = 2, 4, 8, 16, 16

  x = jax.random.normal(k_x, (N, Cin, H, W), dtype=jnp.float32)
  # Deterministic parameter init (synthetic; shapes match nn.Conv2d).
  w3 = jax.random.normal(k_w3, (Cout, Cin, 3, 3), dtype=jnp.float32) * 0.1
  b3 = jax.random.normal(k_b3, (Cout,), dtype=jnp.float32) * 0.1
  w1 = jax.random.normal(k_w1, (Cout, Cin, 1, 1), dtype=jnp.float32) * 0.1
  b1 = jax.random.normal(k_b1, (Cout,), dtype=jnp.float32) * 0.1

  out = residual_block_forward(x, w3, b3, w1, b1)
  out = jax.block_until_ready(out)

  ref = jax.block_until_ready(_reference_forward(x, w3, b3, w1, b1))
  assert out.shape == (N, Cout, H, W), out.shape
  assert jnp.allclose(out, ref, atol=1e-4, rtol=1e-4), (
      float(jnp.max(jnp.abs(out - ref))))

  print("KERNEL_OK")
</pallas_src>

<mosaic_0001>
module attributes {stable_mosaic.version = 11 : i64} {
  func.func @_fused_conv_leakyrelu_kernel(%arg0: i32, %arg1: memref<8x40xf32, #tpu.memory_space<vmem>>, %arg2: memref<8x1xf32, #tpu.memory_space<vmem>>, %arg3: memref<40x512xf32, #tpu.memory_space<vmem>>, %arg4: memref<8x512xf32, #tpu.memory_space<vmem>>) attributes {dimension_semantics = [#tpu.dimension_semantics<parallel>], iteration_bounds = array<i64: 1>, scalar_prefetch = 0 : i64, scratch_operands = 0 : i64, tpu.core_type = #tpu.core_type<tc>, window_params = [{pipeline_mode = #tpu.pipeline_mode<synchronous>, transform_indices = @transform_0, window_bounds = array<i64: 8, 40>}, {pipeline_mode = #tpu.pipeline_mode<synchronous>, transform_indices = @transform_1, window_bounds = array<i64: 8, 1>}, {transform_indices = @transform_2, window_bounds = array<i64: 40, 512>}, {transform_indices = @transform_3, window_bounds = array<i64: 8, 512>}]} {
    %c0 = arith.constant 0 : index
    %c0_0 = arith.constant 0 : index
    %0 = vector.load %arg1[%c0, %c0_0] : memref<8x40xf32, #tpu.memory_space<vmem>>, vector<8x40xf32>
    %c0_1 = arith.constant 0 : index
    %c0_2 = arith.constant 0 : index
    %1 = vector.load %arg3[%c0_1, %c0_2] : memref<40x512xf32, #tpu.memory_space<vmem>>, vector<40x512xf32>
    %cst = arith.constant dense<0.000000e+00> : vector<8x512xf32>
    %2 = tpu.matmul %0, %1, %cst {dimension_numbers = #tpu.dot_dimension_numbers<[1], [0], [0], [1], [0, 0, 1, 1], [], []>} : vector<8x40xf32>, vector<40x512xf32>, vector<8x512xf32> -> vector<8x512xf32>
    %c0_3 = arith.constant 0 : index
    %c0_4 = arith.constant 0 : index
    %3 = vector.load %arg2[%c0_3, %c0_4] : memref<8x1xf32, #tpu.memory_space<vmem>>, vector<8x1xf32>
    %4 = vector.broadcast %3 : vector<8x1xf32> to vector<8x512xf32>
    %5 = arith.addf %2, %4 : vector<8x512xf32>
    %cst_5 = arith.constant 0.000000e+00 : f32
    %6 = vector.broadcast %cst_5 : f32 to vector<8x512xf32>
    %7 = arith.cmpf ogt, %5, %6 : vector<8x512xf32>
    %cst_6 = arith.constant 0.00999999977 : f32
    %8 = vector.broadcast %cst_6 : f32 to vector<8x512xf32>
    %9 = arith.mulf %8, %5 : vector<8x512xf32>
    %10 = arith.select %7, %5, %9 : vector<8x512xi1>, vector<8x512xf32>
    %c0_7 = arith.constant 0 : index
    %c0_8 = arith.constant 0 : index
    %11 = vector.load %arg4[%c0_7, %c0_8] : memref<8x512xf32, #tpu.memory_space<vmem>>, vector<8x512xf32>
    tpu.vector_store %arg4[%c0_7, %c0_8], %10 {strides = array<i32>} : memref<8x512xf32, #tpu.memory_space<vmem>>, vector<8x512xf32>,
    return
  }
  func.func @transform_0(%arg0: i32) -> (i32, i32) {
    %c0_i32 = arith.constant 0 : i32
    %c0_i32_0 = arith.constant 0 : i32
    %c0_i32_1 = arith.constant 0 : i32
    return %c0_i32, %c0_i32_0 : i32, i32
  }
  func.func @transform_1(%arg0: i32) -> (i32, i32) {
    %c0_i32 = arith.constant 0 : i32
    %c0_i32_0 = arith.constant 0 : i32
    %c0_i32_1 = arith.constant 0 : i32
    return %c0_i32, %c0_i32_0 : i32, i32
  }
  func.func @transform_2(%arg0: i32) -> (i32, i32) {
    %c0_i32 = arith.constant 0 : i32
    %c0_i32_0 = arith.constant 0 : i32
    return %c0_i32, %arg0 : i32, i32
  }
  func.func @transform_3(%arg0: i32) -> (i32, i32) {
    %c0_i32 = arith.constant 0 : i32
    %c0_i32_0 = arith.constant 0 : i32
    return %c0_i32, %arg0 : i32, i32
  }
}

</mosaic_0001>

<llo_original>
// kernel: residual_block_forward.1
$region0: #{residual_block_forward.1}
  #allocation0 [shape = 'u32[]', space=smem, size = 0x4, offset = 0x4, fixed_abs, tag = 'smem constant byte address 0x4 - core index']
  #allocation1 [shape = 'u32[144,128]{1,0:T(1,128)}', space=vmem, size = 0x12000, scoped, tag = 'internal scratch']
  %s0 = inlined_call_operand.vmem [shape: f32[8,40], index: 0, kind: input, shape index: {}]
  %s1 = inlined_call_operand.vmem [shape: f32[8,1], index: 1, kind: input, shape index: {}]
  %s2 = inlined_call_operand.vmem [shape: f32[40,512], index: 2, kind: input, shape index: {}]
  %s3 = inlined_call_operand.vmem [shape: f32[8,512], index: 3, kind: output, shape index: {}]
  %s4 = sld [smem:[#allocation0]]
  $region22: #{residual_block_forward.1} parent=0
    _
  %s6 = ssub.s32 1, %s4
  %s7 = scalar_select 0, %s6, %s4
  // Predicated region
  $region2: #{residual_block_forward.1} parent=0 // pred_check
    _
  $region3: #{residual_block_forward.1} parent=0 // pred_check_branch
    %9 = sbr.rel (0) target = $region5
  $region4: #{residual_block_forward.1} parent=0 // pred_region
    _
  $region5: #{residual_block_forward.1} parent=0 // pred_fallthru
    _
  // Predicated region
  $region6: #{residual_block_forward.1} parent=0 // pred_check
    _
  $region7: #{residual_block_forward.1} parent=0 // pred_check_branch
    %11 = sbr.rel (0) target = $region9
  $region8: #{residual_block_forward.1} parent=0 // pred_region
    _
  $region9: #{residual_block_forward.1} parent=0 // pred_fallthru
    _
  // Predicated region
  $region10: #{residual_block_forward.1} parent=0 // pred_check
    _
  $region11: #{residual_block_forward.1} parent=0 // pred_check_branch
    %13 = sbr.rel (0) target = $region13
  $region12: #{residual_block_forward.1} parent=0 // pred_region
    _
  $region13: #{residual_block_forward.1} parent=0 // pred_fallthru
    _
  %v14 = vld [vmem:[%s0] sm:$0xff]
  %v15 = vld [vmem:[%s2] sm:$0xff]
  %v16 = vld [vmem:[%s2 + $0x8] sm:$0xff]
  %v17 = vld [vmem:[%s2 + $0x10] sm:$0xff]
  %v18 = vld [vmem:[%s2 + $0x18] sm:$0xff]
  %v19 = vld [vmem:[%s2 + $0x20] sm:$0xff]
  %v20 = vld [vmem:[%s2 + $0x28] sm:$0xff]
  %v21 = vld [vmem:[%s2 + $0x30] sm:$0xff]
  %v22 = vld [vmem:[%s2 + $0x38] sm:$0xff]
  %v23 = vld [vmem:[%s2 + $0x40] sm:$0xff]
  %v24 = vld [vmem:[%s2 + $0x48] sm:$0xff]
  %v25 = vld [vmem:[%s2 + $0x50] sm:$0xff]
  %v26 = vld [vmem:[%s2 + $0x58] sm:$0xff]
  %v27 = vld [vmem:[%s2 + $0x60] sm:$0xff]
  %v28 = vld [vmem:[%s2 + $0x68] sm:$0xff]
  %v29 = vld [vmem:[%s2 + $0x70] sm:$0xff]
  %v30 = vld [vmem:[%s2 + $0x78] sm:$0xff]
  %v31 = vld [vmem:[%s2 + $0x80] sm:$0xff]
  %v32 = vld [vmem:[%s2 + $0x88] sm:$0xff]
  %v33 = vld [vmem:[%s2 + $0x90] sm:$0xff]
  %v34 = vld [vmem:[%s2 + $0x98] sm:$0xff]
  %v35 = vld [vmem:[%s1] sm:$0xff]
  %37 = vset.pattern.permute.xlu0 0
  %38 = vperm.xlu0 %37, %v35
  %v39 = vpop.permute.xlu0 %38
  %vm41 = vcmask 326656
  %v43 = vsel %vm41, %v14, 0
  %45 = vmatprep.subr.mxu0 %v16
  %46 = vmatpush1.msra.mxu0 %v15
  %47 = vmatprep.subr.mxu0 %v20
  %48 = vmatpush1.msra.mxu0 %v19
  %49 = vmatprep.subr.mxu0 %v24
  %50 = vmatpush1.msra.mxu0 %v23
  %51 = vmatprep.subr.mxu0 %v28
  %52 = vmatpush1.msra.mxu0 %v27
  %53 = vmatprep.subr.mxu0 %v32
  %54 = vmatpush1.msra.mxu0 %v31
  %55 = vmatprep.subr.mxu0 0.0
  %56 = vmatpush1.msra.mxu0 0.0
  %57 = vmatprep.subr.mxu0 0.0
  %58 = vmatpush1.msra.mxu0 0.0
  %59 = vmatprep.subr.mxu0 0.0
  %60 = vmatpush1.msra.mxu0 0.0
  %61 = vmatprep.subr.mxu0 0.0
  %62 = vmatpush1.msra.mxu0 0.0
  %63 = vmatprep.subr.mxu0 0.0
  %64 = vmatpush1.msra.mxu0 0.0
  %65 = vmatprep.subr.mxu0 0.0
  %66 = vmatpush1.msra.mxu0 0.0
  %67 = vmatprep.subr.mxu0 0.0
  %68 = vmatpush1.msra.mxu0 0.0
  %69 = vmatprep.subr.mxu0 0.0
  %70 = vmatpush1.msra.mxu0 0.0
  %71 = vmatprep.subr.mxu0 0.0
  %72 = vmatpush1.msra.mxu0 0.0
  %73 = vmatprep.subr.mxu0 0.0
  %74 = vmatpush1.msra.mxu0 0.0
  %75 = vmatprep.subr.mxu0 0.0
  %76 = vmatpush1.msra.mxu0 0.0
  %77 = vmatprep.subr.mxu0 0.0
  %78 = vmatpush1.msra.mxu0 0.0
  %79 = vmatprep.subr.mxu0 0.0
  %80 = vmatpush1.msra.mxu0 0.0
  %81 = vmatprep.subr.mxu0 0.0
  %82 = vmatpush1.msra.mxu0 0.0
  %83 = vmatprep.subr.mxu0 0.0
  %84 = vmatpush1.msra.mxu0 0.0
  %85 = vmatprep.subr.mxu0 0.0
  %86 = vmatpush1.msra.mxu0 0.0
  %87 = vmatprep.subr.mxu0 0.0
  %88 = vmatpush1.msra.mxu0 0.0
  %89 = vmatprep.subr.mxu0 0.0
  %90 = vmatpush1.msra.mxu0 0.0
  %91 = vmatprep.subr.mxu0 0.0
  %92 = vmatpush1.msra.mxu0 0.0
  %93 = vmatprep.subr.mxu0 0.0
  %94 = vmatpush1.msra.mxu0 0.0
  %95 = vmatprep.subr.mxu0 0.0
  %96 = vmatpush1.msra.mxu0 0.0
  %97 = vmatprep.subr.mxu0 0.0
  %98 = vmatpush1.msra.mxu0 0.0
  %99 = vmatprep.subr.mxu0 0.0
  %100 = vmatpush1.msra.mxu0 0.0
  %101 = vmatprep.subr.mxu0 0.0
  %102 = vmatpush1.msra.mxu0 0.0
  %103 = vmatprep.subr.mxu0 0.0
  %104 = vmatpush1.msra.mxu0 0.0
  %105 = vmatprep.subr.mxu0 0.0
  %106 = vmatpush1.msra.mxu0 0.0
  %107 = vmatprep.subr.mxu0 0.0
  %108 = vmatpush1.msra.mxu0 0.0
  %109 = vmatprep.mubr.f32.mxu0 0.0
  %110 = vmatmul.mubr.f32.gmra.mrb[0].mxu0 %v43
  %v111 = vpop.f32.mrb[0].mxu0
  %v112 = vadd.f32 %v39, %v111
  %v113 = vpop.f32.mrb[0].mxu0
  %v114 = vadd.f32 %v39, %v113
  %115 = vdwg.mxu0
  %116 = vmatprep.subr.mxu0 %v18
  %117 = vmatpush1.msra.mxu0 %v17
  %118 = vmatprep.subr.mxu0 %v22
  %119 = vmatpush1.msra.mxu0 %v21
  %120 = vmatprep.subr.mxu0 %v26
  %121 = vmatpush1.msra.mxu0 %v25
  %122 = vmatprep.subr.mxu0 %v30
  %123 = vmatpush1.msra.mxu0 %v29
  %124 = vmatprep.subr.mxu0 %v34
  %125 = vmatpush1.msra.mxu0 %v33
  %126 = vmatprep.subr.mxu0 0.0
  %127 = vmatpush1.msra.mxu0 0.0
  %128 = vmatprep.subr.mxu0 0.0
  %129 = vmatpush1.msra.mxu0 0.0
  %130 = vmatprep.subr.mxu0 0.0
  %131 = vmatpush1.msra.mxu0 0.0
  %132 = vmatprep.subr.mxu0 0.0
  %133 = vmatpush1.msra.mxu0 0.0
  %134 = vmatprep.subr.mxu0 0.0
  %135 = vmatpush1.msra.mxu0 0.0
  %136 = vmatprep.subr.mxu0 0.0
  %137 = vmatpush1.msra.mxu0 0.0
  %138 = vmatprep.subr.mxu0 0.0
  %139 = vmatpush1.msra.mxu0 0.0
  %140 = vmatprep.subr.mxu0 0.0
  %141 = vmatpush1.msra.mxu0 0.0
  %142 = vmatprep.subr.mxu0 0.0
  %143 = vmatpush1.msra.mxu0 0.0
  %144 = vmatprep.subr.mxu0 0.0
  %145 = vmatpush1.msra.mxu0 0.0
  %146 = vmatprep.subr.mxu0 0.0
  %147 = vmatpush1.msra.mxu0 0.0
  %148 = vmatprep.subr.mxu0 0.0
  %149 = vmatpush1.msra.mxu0 0.0
  %150 = vmatprep.subr.mxu0 0.0
  %151 = vmatpush1.msra.mxu0 0.0
  %152 = vmatprep.subr.mxu0 0.0
  %153 = vmatpush1.msra.mxu0 0.0
  %154 = vmatprep.subr.mxu0 0.0
  %155 = vmatpush1.msra.mxu0 0.0
  %156 = vmatprep.subr.mxu0 0.0
  %157 = vmatpush1.msra.mxu0 0.0
  %158 = vmatprep.subr.mxu0 0.0
  %159 = vmatpush1.msra.mxu0 0.0
  %160 = vmatprep.subr.mxu0 0.0
  %161 = vmatpush1.msra.mxu0 0.0
  %162 = vmatprep.subr.mxu0 0.0
  %163 = vmatpush1.msra.mxu0 0.0
  %164 = vmatprep.subr.mxu0 0.0
  %165 = vmatpush1.msra.mxu0 0.0
  %166 = vmatprep.subr.mxu0 0.0
  %167 = vmatpush1.msra.mxu0 0.0
  %168 = vmatprep.subr.mxu0 0.0
  %169 = vmatpush1.msra.mxu0 0.0
  %170 = vmatprep.subr.mxu0 0.0
  %171 = vmatpush1.msra.mxu0 0.0
  %172 = vmatprep.subr.mxu0 0.0
  %173 = vmatpush1.msra.mxu0 0.0
  %174 = vmatprep.subr.mxu0 0.0
  %175 = vmatpush1.msra.mxu0 0.0
  %176 = vmatprep.subr.mxu0 0.0
  %177 = vmatpush1.msra.mxu0 0.0
  %178 = vmatprep.subr.mxu0 0.0
  %179 = vmatpush1.msra.mxu0 0.0
  %180 = vmatprep.mubr.f32.mxu0 0.0
  %181 = vmatmul.mubr.f32.gmra.mrb[0].mxu0 %v43
  %v182 = vpop.f32.mrb[0].mxu0
  %v183 = vadd.f32 %v39, %v182
  %v184 = vpop.f32.mrb[0].mxu0
  %v185 = vadd.f32 %v39, %v184
  %186 = vdwg.mxu0
  %vm187 = vcmp.gt.f32.partialorder %v112, 0.0
  %vm188 = vcmp.gt.f32.partialorder %v114, 0.0
  %vm189 = vcmp.gt.f32.partialorder %v183, 0.0
  %vm190 = vcmp.gt.f32.partialorder %v185, 0.0
  %v191 = vmul.f32 %v112, 0.01
  %v192 = vmul.f32 %v114, 0.01
  %v193 = vmul.f32 %v183, 0.01
  %v194 = vmul.f32 %v185, 0.01
  %v195 = vsel %vm187, %v112, %v191
  %v196 = vsel %vm188, %v114, %v192
  %v197 = vsel %vm189, %v183, %v193
  %v198 = vsel %vm190, %v185, %v194
  %199 = vst [vmem:[%s3] sm:$0xff] %v195
  %200 = vst [vmem:[%s3 + $0x8] sm:$0xff] %v196
  %201 = vst [vmem:[%s3 + $0x10] sm:$0xff] %v197
  %202 = vst [vmem:[%s3 + $0x18] sm:$0xff] %v198
  // Predicated region
  $region14: #{residual_block_forward.1} parent=0 // pred_check
    _
  $region15: #{residual_block_forward.1} parent=0 // pred_check_branch
    %204 = sbr.rel (0) target = $region17
  $region16: #{residual_block_forward.1} parent=0 // pred_region
    _
  $region17: #{residual_block_forward.1} parent=0 // pred_fallthru
    _
  // Predicated region
  $region18: #{residual_block_forward.1} parent=0 // pred_check
    _
  $region19: #{residual_block_forward.1} parent=0 // pred_check_branch
    %206 = sbr.rel (0) target = $region21
  $region20: #{residual_block_forward.1} parent=0 // pred_region
    _
  $region21: #{residual_block_forward.1} parent=0 // pred_fallthru
    _

</llo_original>
